<compile_context>
chip_gen: v7x
topology: tpu7x:2x2x1
jax: 0.10.0
libtpu: 0.0.40
codegen_flags: <defaults>
</compile_context>

<pallas_src>
import math

import jax
import jax.numpy as jnp
from jax import lax
from jax.experimental import pallas as pl
from jax.experimental.pallas import tpu as pltpu


# ----------------------------------------------------------------------------
# Pallas kernel factory (L, H baked in as static constants).
# ----------------------------------------------------------------------------
def _make_kernel(L, H):
    f32 = jnp.float32
    bf16 = jnp.bfloat16

    def silu(v):
        # SiLU(v) = v * sigmoid(v); sigmoid via tanh -> a single EUP push per
        # element (vs exp + reciprocal = two), keeping the lone EUP slot free.
        return v * (0.5 * jnp.tanh(0.5 * v) + 0.5)

    def mm(w_bf16, act):
        # bf16 MXU operands (weights pre-cast), f32 accumulation.
        return jnp.dot(w_bf16, act.astype(bf16), preferred_element_type=f32)

    def kernel(x_ref, w_ps_ref, b_ps_ref, wk1_ref, bk1_ref,
               wk3_ref, bk3_ref, w_out_ref, b_out_ref, o_ref):
        R = x_ref.shape[1]                 # lanes in this block = bt * L (multiple of 128)
        x = x_ref[...]                     # (Cin, R) f32: channels on sublanes, rows on lanes

        # Hoisted within-sequence boundary masks, reused by all 4 residual blocks.
        # Each block holds whole sequences, so (local lane index % L) is the
        # position inside the sequence.
        lpos = lax.broadcasted_iota(jnp.int32, (H, R), 1) % L
        not_first = (lpos != 0).astype(f32)        # 0 where a[l-1] is the "same" pad
        not_last = (lpos != (L - 1)).astype(f32)   # 0 where a[l+1] is the "same" pad

        # conv1d_bn_relu_1 (pre) + conv1d_bn_relu_2 (side) share RHS x:
        # one (2H, Cin) @ (Cin, R) matmul; the split is a free sublane slice.
        ps = silu(mm(w_ps_ref[...], x) + b_ps_ref[...])      # (2H, R)
        inp2 = ps[:H]
        side = ps[H:]

        h = inp2
        for r in range(4):                 # residual_1 .. residual_4 (unrolled)
            # Two k=1 convs sharing LHS h -> one (2H, H) @ (H, R) matmul.
            ac = silu(mm(wk1_ref[r], h) + bk1_ref[r])         # (2H, R)
            a = ac[:H]
            c_branch = ac[H:]

            # k=3 / pad=1 conv: XLU lane rolls + boundary masks; taps stacked on
            # sublanes (near-free) -> one (H, 3H) @ (3H, R) matmul.
            a_m1 = pltpu.roll(a, shift=1, axis=1) * not_first       # a[l-1]
            a_p1 = pltpu.roll(a, shift=R - 1, axis=1) * not_last    # a[l+1]
            taps = jnp.concatenate([a_m1, a, a_p1], axis=0)         # (3H, R)
            b_branch = silu(mm(wk3_ref[r], taps) + bk3_ref[r])      # (H, R)

            h = b_branch + c_branch

        x_main = h + inp2                                           # (H, R)

        # conv1d_bn_relu_3 on [x_main ; side]: sublane concat -> (Cin, 2H) @ (2H, R).
        cat = jnp.concatenate([x_main, side], axis=0)               # (2H, R)
        out = silu(mm(w_out_ref[...], cat) + b_out_ref[...])        # (Cin, R)
        o_ref[...] = out.astype(o_ref.dtype)                        # lane-dense store

    return kernel


# ----------------------------------------------------------------------------
# Tiling: whole sequences per block, lane-dense R, bounded padding, >=2 steps.
# ----------------------------------------------------------------------------
_PARAM_ORDER = ("w_ps", "b_ps", "wk1", "bk1", "wk3", "bk3", "w_out", "b_out")


def _pick_tiling(N, L, rows_per_block):
    """Return (bt, n_pad): sequences per block and padded batch size."""
    bt0 = 128 // math.gcd(L, 128)                    # smallest bt with bt*L % 128 == 0
    bt = bt0 * max(1, rows_per_block // (bt0 * L))   # grow toward the row budget
    bt = min(bt, -(-N // bt0) * bt0)                 # never exceed the (padded) batch
    while bt > bt0 and -(-N // bt) < 2:              # keep >= 2 grid steps when possible
        bt -= bt0
    n_pad = -(-N // bt) * bt
    return bt, n_pad


def residual_max_forward(x, params, *, rows_per_block=1024):
    """x: (N, Cin, L) -- the PyTorch Conv1d layout.  Returns (N, Cin, L)."""
    N, Cin, L = x.shape
    H = params["w_ps"].shape[0] // 2

    bt, n_pad = _pick_tiling(N, L, rows_per_block)
    R = bt * L
    n_blocks = n_pad // bt

    # Channels on sublanes, flattened (batch, position) rows on lanes.
    xt = jnp.transpose(x, (1, 0, 2))                 # (Cin, N, L)
    if n_pad != N:
        xt = jnp.pad(xt, ((0, 0), (0, n_pad - N), (0, 0)))
    x2 = xt.reshape(Cin, n_pad * L)

    args = [params[k] for k in _PARAM_ORDER]

    def full_spec(a):
        nd = a.ndim
        return pl.BlockSpec(a.shape, lambda i, _nd=nd: (0,) * _nd)

    out2 = pl.pallas_call(
        _make_kernel(L, H),
        out_shape=jax.ShapeDtypeStruct((Cin, n_pad * L), x.dtype),
        grid_spec=pltpu.PrefetchScalarGridSpec(
            num_scalar_prefetch=0,
            grid=(n_blocks,),
            in_specs=[pl.BlockSpec((Cin, R), lambda i: (0, i))]
                     + [full_spec(a) for a in args],
            out_specs=pl.BlockSpec((Cin, R), lambda i: (0, i)),
        ),
        compiler_params=pltpu.CompilerParams(dimension_semantics=("parallel",)),
    )(x2, *args)

    out = out2.reshape(Cin, n_pad, L)[:, :N]
    return jnp.transpose(out, (1, 0, 2))             # (N, Cin, L)


# ----------------------------------------------------------------------------
# Deterministic parameter construction + BatchNorm folding + weight fusion.
# Weights are stored in the transposed (Cout, Cin) layout used by the kernel.
# ----------------------------------------------------------------------------
def _fold_cbr(key, cin, cout, k):
    """Conv1d(cin, cout, k) + BatchNorm1d(cout) folded into (cout, cin, k), (cout,)."""
    ks = jax.random.split(key, 6)
    w = jax.random.normal(ks[0], (cout, cin, k), jnp.float32) / jnp.sqrt(cin * k)
    b = 0.1 * jax.random.normal(ks[1], (cout,), jnp.float32)
    gamma = 1.0 + 0.1 * jax.random.normal(ks[2], (cout,), jnp.float32)
    beta = 0.1 * jax.random.normal(ks[3], (cout,), jnp.float32)
    rmean = 0.1 * jax.random.normal(ks[4], (cout,), jnp.float32)
    rvar = 1.0 + 0.1 * jax.random.uniform(ks[5], (cout,), jnp.float32)
    scale = gamma / jnp.sqrt(rvar + 1e-5)
    w_eff = w * scale[:, None, None]                 # (cout, cin, k)
    b_eff = (b - rmean) * scale + beta
    return w_eff, b_eff


def init_params(key, cin):
    h = cin // 2
    bf16 = jnp.bfloat16
    keys = jax.random.split(key, 15)
    ki = iter(keys)

    w_pre, b_pre = _fold_cbr(next(ki), cin, h, 1)            # conv1d_bn_relu_1

    wk1, bk1, wk3, bk3 = [], [], [], []
    for _ in range(4):                                       # residual_1 .. residual_4
        w1, b1 = _fold_cbr(next(ki), h, h, 1)
        w2, b2 = _fold_cbr(next(ki), h, h, 3)
        w3, b3 = _fold_cbr(next(ki), h, h, 1)
        wk1.append(jnp.concatenate([w1[..., 0], w3[..., 0]], axis=0))        # (2h, h)
        bk1.append(jnp.concatenate([b1, b3])[:, None])                       # (2h, 1)
        # columns grouped by tap: [tap-1 ; tap0 ; tap+1]
        wk3.append(jnp.transpose(w2, (0, 2, 1)).reshape(h, 3 * h))           # (h, 3h)
        bk3.append(b2[:, None])                                              # (h, 1)

    w_side, b_side = _fold_cbr(next(ki), cin, h, 1)          # conv1d_bn_relu_2
    w_out, b_out = _fold_cbr(next(ki), cin, cin, 1)          # conv1d_bn_relu_3

    return dict(
        w_ps=jnp.concatenate([w_pre[..., 0], w_side[..., 0]], axis=0).astype(bf16),  # (2h, cin)
        b_ps=jnp.concatenate([b_pre, b_side])[:, None],                              # (2h, 1) f32
        wk1=jnp.stack(wk1).astype(bf16),      # (4, 2h, h)
        bk1=jnp.stack(bk1),                   # (4, 2h, 1) f32
        wk3=jnp.stack(wk3).astype(bf16),      # (4, h, 3h)
        bk3=jnp.stack(bk3),                   # (4, h, 1) f32
        w_out=w_out[..., 0].astype(bf16),     # (cin, cin), input cols = [x_main ; side]
        b_out=b_out[:, None],                 # (cin, 1) f32
    )


# ----------------------------------------------------------------------------
# Pure-JAX reference (f32, HIGHEST precision), for correctness checking only.
# ----------------------------------------------------------------------------
def ref_forward(x, params):
    hp = jax.lax.Precision.HIGHEST
    f32 = jnp.float32
    H = params["w_ps"].shape[0] // 2
    silu = lambda v: v * jax.nn.sigmoid(v)
    conv = lambda w, v: jnp.einsum("oc,ncl->nol", w.astype(f32), v, precision=hp)

    ps = silu(conv(params["w_ps"], x) + params["b_ps"])
    inp2, side = ps[:, :H], ps[:, H:]

    h = inp2
    for r in range(4):
        ac = silu(conv(params["wk1"][r], h) + params["bk1"][r])
        a, c = ac[:, :H], ac[:, H:]
        L = a.shape[-1]
        ap = jnp.pad(a, ((0, 0), (0, 0), (1, 1)))
        taps = jnp.concatenate([ap[..., 0:L], ap[..., 1:L + 1], ap[..., 2:L + 2]], axis=1)
        bb = silu(conv(params["wk3"][r], taps) + params["bk3"][r])
        h = bb + c
    xm = h + inp2
    cat = jnp.concatenate([xm, side], axis=1)
    return silu(conv(params["w_out"], cat) + params["b_out"])


if __name__ == "__main__":
    key = jax.random.PRNGKey(0)
    kx1, kx2, kp = jax.random.split(key, 3)

    Cin, L = 16, 32                       # torch input layout is (N, Cin, L)
    params = init_params(kp, Cin)

    ok = True
    # Case 1: tiny batch -> single 128-lane block (2 real + 2 padded sequences).
    # Case 2: batch of 6 -> 2 grid steps of 4 sequences, tail block padded.
    for name, N, kx in (("single-block", 2, kx1), ("tiled+padded", 6, kx2)):
        x = jax.random.normal(kx, (N, Cin, L), jnp.float32)
        out = jax.block_until_ready(residual_max_forward(x, params))
        assert out.shape == (N, Cin, L), (name, out.shape)
        ref = ref_forward(x, params)
        # bf16 MXU operands across ~10 chained matmuls -> allow a few % drift
        # vs. the f32 HIGHEST-precision reference.
        if not bool(jnp.allclose(out, ref, atol=5e-2, rtol=5e-2)):
            ok = False
            print(f"{name}: mismatch, max abs err = "
                  f"{float(jnp.max(jnp.abs(out - ref)))}")
    if not ok:
        raise AssertionError("kernel/reference mismatch")
    print("KERNEL_OK")
</pallas_src>

<mosaic_0001>
module attributes {stable_mosaic.version = 11 : i64} {
  func.func @kernel(%arg0: i32, %arg1: memref<16x128xf32, #tpu.memory_space<vmem>>, %arg2: memref<16x16xbf16, #tpu.memory_space<vmem>>, %arg3: memref<16x1xf32, #tpu.memory_space<vmem>>, %arg4: memref<4x16x8xbf16, #tpu.memory_space<vmem>>, %arg5: memref<4x16x1xf32, #tpu.memory_space<vmem>>, %arg6: memref<4x8x24xbf16, #tpu.memory_space<vmem>>, %arg7: memref<4x8x1xf32, #tpu.memory_space<vmem>>, %arg8: memref<16x16xbf16, #tpu.memory_space<vmem>>, %arg9: memref<16x1xf32, #tpu.memory_space<vmem>>, %arg10: memref<16x128xf32, #tpu.memory_space<vmem>>) attributes {dimension_semantics = [#tpu.dimension_semantics<parallel>], iteration_bounds = array<i64: 1>, scalar_prefetch = 0 : i64, scratch_operands = 0 : i64, tpu.core_type = #tpu.core_type<tc>, window_params = [{transform_indices = @transform_0, window_bounds = array<i64: 16, 128>}, {pipeline_mode = #tpu.pipeline_mode<synchronous>, transform_indices = @transform_1, window_bounds = array<i64: 16, 16>}, {pipeline_mode = #tpu.pipeline_mode<synchronous>, transform_indices = @transform_2, window_bounds = array<i64: 16, 1>}, {pipeline_mode = #tpu.pipeline_mode<synchronous>, transform_indices = @transform_3, window_bounds = array<i64: 4, 16, 8>}, {pipeline_mode = #tpu.pipeline_mode<synchronous>, transform_indices = @transform_4, window_bounds = array<i64: 4, 16, 1>}, {pipeline_mode = #tpu.pipeline_mode<synchronous>, transform_indices = @transform_5, window_bounds = array<i64: 4, 8, 24>}, {pipeline_mode = #tpu.pipeline_mode<synchronous>, transform_indices = @transform_6, window_bounds = array<i64: 4, 8, 1>}, {pipeline_mode = #tpu.pipeline_mode<synchronous>, transform_indices = @transform_7, window_bounds = array<i64: 16, 16>}, {pipeline_mode = #tpu.pipeline_mode<synchronous>, transform_indices = @transform_8, window_bounds = array<i64: 16, 1>}, {transform_indices = @transform_9, window_bounds = array<i64: 16, 128>}]} {
    %c0 = arith.constant 0 : index
    %c0_0 = arith.constant 0 : index
    %0 = vector.load %arg1[%c0, %c0_0] : memref<16x128xf32, #tpu.memory_space<vmem>>, vector<16x128xf32>
    %1 = tpu.iota {dimensions = array<i32: 1>} : vector<8x128xi32>
    %c32_i32 = arith.constant 32 : i32
    %c0_i32 = arith.constant 0 : i32
    %2 = arith.cmpi eq, %c32_i32, %c0_i32 : i32
    %c1_i32 = arith.constant 1 : i32
    %3 = arith.select %2, %c1_i32, %c32_i32 : i32
    %4 = vector.broadcast %3 : i32 to vector<8x128xi32>
    %5 = arith.remsi %1, %4 : vector<8x128xi32>
    %c0_i32_1 = arith.constant 0 : i32
    %6 = vector.broadcast %c0_i32_1 : i32 to vector<8x128xi32>
    %7 = arith.cmpi ne, %5, %6 : vector<8x128xi32>
    %c0_i32_2 = arith.constant 0 : i32
    %8 = vector.broadcast %c0_i32_2 : i32 to vector<8x128xi32>
    %9 = arith.cmpi slt, %5, %8 : vector<8x128xi32>
    %c0_i32_3 = arith.constant 0 : i32
    %10 = arith.cmpi slt, %3, %c0_i32_3 : i32
    %11 = vector.broadcast %10 : i1 to vector<8x128xi1>
    %12 = vector.broadcast %11 : vector<8x128xi1> to vector<8x128xi1>
    %13 = arith.xori %9, %12 : vector<8x128xi1>
    %14 = arith.andi %13, %7 : vector<8x128xi1>
    %15 = vector.broadcast %3 : i32 to vector<8x128xi32>
    %16 = arith.addi %5, %15 : vector<8x128xi32>
    %17 = arith.select %14, %16, %5 : vector<8x128xi1>, vector<8x128xi32>
    %c0_i32_4 = arith.constant 0 : i32
    %18 = vector.broadcast %c0_i32_4 : i32 to vector<8x128xi32>
    %19 = arith.cmpi ne, %17, %18 : vector<8x128xi32>
    %20 = arith.extui %19 : vector<8x128xi1> to vector<8x128xi32>
    %21 = arith.sitofp %20 : vector<8x128xi32> to vector<8x128xf32>
    %c31_i32 = arith.constant 31 : i32
    %22 = vector.broadcast %c31_i32 : i32 to vector<8x128xi32>
    %23 = arith.cmpi ne, %17, %22 : vector<8x128xi32>
    %24 = arith.extui %23 : vector<8x128xi1> to vector<8x128xi32>
    %25 = arith.sitofp %24 : vector<8x128xi32> to vector<8x128xf32>
    %c0_5 = arith.constant 0 : index
    %c0_6 = arith.constant 0 : index
    %26 = vector.load %arg2[%c0_5, %c0_6] : memref<16x16xbf16, #tpu.memory_space<vmem>>, vector<16x16xbf16>
    %27 = arith.truncf %0 : vector<16x128xf32> to vector<16x128xbf16>
    %cst = arith.constant dense<0.000000e+00> : vector<16x128xf32>
    %28 = tpu.matmul %26, %27, %cst {dimension_numbers = #tpu.dot_dimension_numbers<[1], [0], [0], [1], [0, 0, 1, 1], [], []>} : vector<16x16xbf16>, vector<16x128xbf16>, vector<16x128xf32> -> vector<16x128xf32>
    %c0_7 = arith.constant 0 : index
    %c0_8 = arith.constant 0 : index
    %29 = vector.load %arg3[%c0_7, %c0_8] : memref<16x1xf32, #tpu.memory_space<vmem>>, vector<16x1xf32>
    %30 = vector.broadcast %29 : vector<16x1xf32> to vector<16x128xf32>
    %31 = arith.addf %28, %30 : vector<16x128xf32>
    %cst_9 = arith.constant 5.000000e-01 : f32
    %32 = vector.broadcast %cst_9 : f32 to vector<16x128xf32>
    %33 = arith.mulf %32, %31 : vector<16x128xf32>
    %34 = math.tanh %33 : vector<16x128xf32>
    %cst_10 = arith.constant 5.000000e-01 : f32
    %35 = vector.broadcast %cst_10 : f32 to vector<16x128xf32>
    %36 = arith.mulf %35, %34 : vector<16x128xf32>
    %cst_11 = arith.constant 5.000000e-01 : f32
    %37 = vector.broadcast %cst_11 : f32 to vector<16x128xf32>
    %38 = arith.addf %36, %37 : vector<16x128xf32>
    %39 = arith.mulf %31, %38 : vector<16x128xf32>
    %40 = vector.extract_strided_slice %39 {offsets = [0, 0], sizes = [8, 128], strides = [1, 1]} : vector<16x128xf32> to vector<8x128xf32>
    %41 = vector.extract_strided_slice %39 {offsets = [8, 0], sizes = [8, 128], strides = [1, 1]} : vector<16x128xf32> to vector<8x128xf32>
    %c0_12 = arith.constant 0 : index
    %c0_13 = arith.constant 0 : index
    %c0_14 = arith.constant 0 : index
    %42 = vector.load %arg4[%c0_12, %c0_13, %c0_14] : memref<4x16x8xbf16, #tpu.memory_space<vmem>>, vector<1x16x8xbf16>
    %43 = vector.shape_cast %42 : vector<1x16x8xbf16> to vector<16x8xbf16>
    %44 = arith.truncf %40 : vector<8x128xf32> to vector<8x128xbf16>
    %cst_15 = arith.constant dense<0.000000e+00> : vector<16x128xf32>
    %45 = tpu.matmul %43, %44, %cst_15 {dimension_numbers = #tpu.dot_dimension_numbers<[1], [0], [0], [1], [0, 0, 1, 1], [], []>} : vector<16x8xbf16>, vector<8x128xbf16>, vector<16x128xf32> -> vector<16x128xf32>
    %c0_16 = arith.constant 0 : index
    %c0_17 = arith.constant 0 : index
    %c0_18 = arith.constant 0 : index
    %46 = vector.load %arg5[%c0_16, %c0_17, %c0_18] : memref<4x16x1xf32, #tpu.memory_space<vmem>>, vector<1x16x1xf32>
    %47 = vector.shape_cast %46 : vector<1x16x1xf32> to vector<16x1xf32>
    %48 = vector.broadcast %47 : vector<16x1xf32> to vector<16x128xf32>
    %49 = arith.addf %45, %48 : vector<16x128xf32>
    %cst_19 = arith.constant 5.000000e-01 : f32
    %50 = vector.broadcast %cst_19 : f32 to vector<16x128xf32>
    %51 = arith.mulf %50, %49 : vector<16x128xf32>
    %52 = math.tanh %51 : vector<16x128xf32>
    %cst_20 = arith.constant 5.000000e-01 : f32
    %53 = vector.broadcast %cst_20 : f32 to vector<16x128xf32>
    %54 = arith.mulf %53, %52 : vector<16x128xf32>
    %cst_21 = arith.constant 5.000000e-01 : f32
    %55 = vector.broadcast %cst_21 : f32 to vector<16x128xf32>
    %56 = arith.addf %54, %55 : vector<16x128xf32>
    %57 = arith.mulf %49, %56 : vector<16x128xf32>
    %58 = vector.extract_strided_slice %57 {offsets = [0, 0], sizes = [8, 128], strides = [1, 1]} : vector<16x128xf32> to vector<8x128xf32>
    %59 = vector.extract_strided_slice %57 {offsets = [8, 0], sizes = [8, 128], strides = [1, 1]} : vector<16x128xf32> to vector<8x128xf32>
    %c1_i32_22 = arith.constant 1 : i32
    %60 = tpu.dynamic_rotate %58 by %c1_i32_22 dim 1 : vector<8x128xf32>, i32 -> vector<8x128xf32>
    %61 = arith.mulf %60, %21 : vector<8x128xf32>
    %c127_i32 = arith.constant 127 : i32
    %62 = tpu.dynamic_rotate %58 by %c127_i32 dim 1 : vector<8x128xf32>, i32 -> vector<8x128xf32>
    %63 = arith.mulf %62, %25 : vector<8x128xf32>
    %64 = tpu.concatenate %61, %58, %63 in 0 : vector<8x128xf32>, vector<8x128xf32>, vector<8x128xf32> -> vector<24x128xf32>
    %c0_23 = arith.constant 0 : index
    %c0_24 = arith.constant 0 : index
    %c0_25 = arith.constant 0 : index
    %65 = vector.load %arg6[%c0_23, %c0_24, %c0_25] : memref<4x8x24xbf16, #tpu.memory_space<vmem>>, vector<1x8x24xbf16>
    %66 = vector.shape_cast %65 : vector<1x8x24xbf16> to vector<8x24xbf16>
    %67 = arith.truncf %64 : vector<24x128xf32> to vector<24x128xbf16>
    %cst_26 = arith.constant dense<0.000000e+00> : vector<8x128xf32>
    %68 = tpu.matmul %66, %67, %cst_26 {dimension_numbers = #tpu.dot_dimension_numbers<[1], [0], [0], [1], [0, 0, 1, 1], [], []>} : vector<8x24xbf16>, vector<24x128xbf16>, vector<8x128xf32> -> vector<8x128xf32>
    %c0_27 = arith.constant 0 : index
    %c0_28 = arith.constant 0 : index
    %c0_29 = arith.constant 0 : index
    %69 = vector.load %arg7[%c0_27, %c0_28, %c0_29] : memref<4x8x1xf32, #tpu.memory_space<vmem>>, vector<1x8x1xf32>
    %70 = vector.shape_cast %69 : vector<1x8x1xf32> to vector<8x1xf32>
    %71 = vector.broadcast %70 : vector<8x1xf32> to vector<8x128xf32>
    %72 = arith.addf %68, %71 : vector<8x128xf32>
    %cst_30 = arith.constant 5.000000e-01 : f32
    %73 = vector.broadcast %cst_30 : f32 to vector<8x128xf32>
    %74 = arith.mulf %73, %72 : vector<8x128xf32>
    %75 = math.tanh %74 : vector<8x128xf32>
    %cst_31 = arith.constant 5.000000e-01 : f32
    %76 = vector.broadcast %cst_31 : f32 to vector<8x128xf32>
    %77 = arith.mulf %76, %75 : vector<8x128xf32>
    %cst_32 = arith.constant 5.000000e-01 : f32
    %78 = vector.broadcast %cst_32 : f32 to vector<8x128xf32>
    %79 = arith.addf %77, %78 : vector<8x128xf32>
    %80 = arith.mulf %72, %79 : vector<8x128xf32>
    %81 = arith.addf %80, %59 : vector<8x128xf32>
    %c1 = arith.constant 1 : index
    %c0_33 = arith.constant 0 : index
    %c0_34 = arith.constant 0 : index
    %82 = vector.load %arg4[%c1, %c0_33, %c0_34] : memref<4x16x8xbf16, #tpu.memory_space<vmem>>, vector<1x16x8xbf16>
    %83 = vector.shape_cast %82 : vector<1x16x8xbf16> to vector<16x8xbf16>
    %84 = arith.truncf %81 : vector<8x128xf32> to vector<8x128xbf16>
    %cst_35 = arith.constant dense<0.000000e+00> : vector<16x128xf32>
    %85 = tpu.matmul %83, %84, %cst_35 {dimension_numbers = #tpu.dot_dimension_numbers<[1], [0], [0], [1], [0, 0, 1, 1], [], []>} : vector<16x8xbf16>, vector<8x128xbf16>, vector<16x128xf32> -> vector<16x128xf32>
    %c1_36 = arith.constant 1 : index
    %c0_37 = arith.constant 0 : index
    %c0_38 = arith.constant 0 : index
    %86 = vector.load %arg5[%c1_36, %c0_37, %c0_38] : memref<4x16x1xf32, #tpu.memory_space<vmem>>, vector<1x16x1xf32>
    %87 = vector.shape_cast %86 : vector<1x16x1xf32> to vector<16x1xf32>
    %88 = vector.broadcast %87 : vector<16x1xf32> to vector<16x128xf32>
    %89 = arith.addf %85, %88 : vector<16x128xf32>
    %cst_39 = arith.constant 5.000000e-01 : f32
    %90 = vector.broadcast %cst_39 : f32 to vector<16x128xf32>
    %91 = arith.mulf %90, %89 : vector<16x128xf32>
    %92 = math.tanh %91 : vector<16x128xf32>
    %cst_40 = arith.constant 5.000000e-01 : f32
    %93 = vector.broadcast %cst_40 : f32 to vector<16x128xf32>
    %94 = arith.mulf %93, %92 : vector<16x128xf32>
    %cst_41 = arith.constant 5.000000e-01 : f32
    %95 = vector.broadcast %cst_41 : f32 to vector<16x128xf32>
    %96 = arith.addf %94, %95 : vector<16x128xf32>
    %97 = arith.mulf %89, %96 : vector<16x128xf32>
    %98 = vector.extract_strided_slice %97 {offsets = [0, 0], sizes = [8, 128], strides = [1, 1]} : vector<16x128xf32> to vector<8x128xf32>
    %99 = vector.extract_strided_slice %97 {offsets = [8, 0], sizes = [8, 128], strides = [1, 1]} : vector<16x128xf32> to vector<8x128xf32>
    %c1_i32_42 = arith.constant 1 : i32
    %100 = tpu.dynamic_rotate %98 by %c1_i32_42 dim 1 : vector<8x128xf32>, i32 -> vector<8x128xf32>
    %101 = arith.mulf %100, %21 : vector<8x128xf32>
    %c127_i32_43 = arith.constant 127 : i32
    %102 = tpu.dynamic_rotate %98 by %c127_i32_43 dim 1 : vector<8x128xf32>, i32 -> vector<8x128xf32>
    %103 = arith.mulf %102, %25 : vector<8x128xf32>
    %104 = tpu.concatenate %101, %98, %103 in 0 : vector<8x128xf32>, vector<8x128xf32>, vector<8x128xf32> -> vector<24x128xf32>
    %c1_44 = arith.constant 1 : index
    %c0_45 = arith.constant 0 : index
    %c0_46 = arith.constant 0 : index
    %105 = vector.load %arg6[%c1_44, %c0_45, %c0_46] : memref<4x8x24xbf16, #tpu.memory_space<vmem>>, vector<1x8x24xbf16>
    %106 = vector.shape_cast %105 : vector<1x8x24xbf16> to vector<8x24xbf16>
    %107 = arith.truncf %104 : vector<24x128xf32> to vector<24x128xbf16>
    %cst_47 = arith.constant dense<0.000000e+00> : vector<8x128xf32>
    %108 = tpu.matmul %106, %107, %cst_47 {dimension_numbers = #tpu.dot_dimension_numbers<[1], [0], [0], [1], [0, 0, 1, 1], [], []>} : vector<8x24xbf16>, vector<24x128xbf16>, vector<8x128xf32> -> vector<8x128xf32>
    %c1_48 = arith.constant 1 : index
    %c0_49 = arith.constant 0 : index
    %c0_50 = arith.constant 0 : index
    %109 = vector.load %arg7[%c1_48, %c0_49, %c0_50] : memref<4x8x1xf32, #tpu.memory_space<vmem>>, vector<1x8x1xf32>
    %110 = vector.shape_cast %109 : vector<1x8x1xf32> to vector<8x1xf32>
    %111 = vector.broadcast %110 : vector<8x1xf32> to vector<8x128xf32>
    %112 = arith.addf %108, %111 : vector<8x128xf32>
    %cst_51 = arith.constant 5.000000e-01 : f32
    %113 = vector.broadcast %cst_51 : f32 to vector<8x128xf32>
    %114 = arith.mulf %113, %112 : vector<8x128xf32>
    %115 = math.tanh %114 : vector<8x128xf32>
    %cst_52 = arith.constant 5.000000e-01 : f32
    %116 = vector.broadcast %cst_52 : f32 to vector<8x128xf32>
    %117 = arith.mulf %116, %115 : vector<8x128xf32>
    %cst_53 = arith.constant 5.000000e-01 : f32
    %118 = vector.broadcast %cst_53 : f32 to vector<8x128xf32>
    %119 = arith.addf %117, %118 : vector<8x128xf32>
    %120 = arith.mulf %112, %119 : vector<8x128xf32>
    %121 = arith.addf %120, %99 : vector<8x128xf32>
    %c2 = arith.constant 2 : index
    %c0_54 = arith.constant 0 : index
    %c0_55 = arith.constant 0 : index
    %122 = vector.load %arg4[%c2, %c0_54, %c0_55] : memref<4x16x8xbf16, #tpu.memory_space<vmem>>, vector<1x16x8xbf16>
    %123 = vector.shape_cast %122 : vector<1x16x8xbf16> to vector<16x8xbf16>
    %124 = arith.truncf %121 : vector<8x128xf32> to vector<8x128xbf16>
    %cst_56 = arith.constant dense<0.000000e+00> : vector<16x128xf32>
    %125 = tpu.matmul %123, %124, %cst_56 {dimension_numbers = #tpu.dot_dimension_numbers<[1], [0], [0], [1], [0, 0, 1, 1], [], []>} : vector<16x8xbf16>, vector<8x128xbf16>, vector<16x128xf32> -> vector<16x128xf32>
    %c2_57 = arith.constant 2 : index
    %c0_58 = arith.constant 0 : index
    %c0_59 = arith.constant 0 : index
    %126 = vector.load %arg5[%c2_57, %c0_58, %c0_59] : memref<4x16x1xf32, #tpu.memory_space<vmem>>, vector<1x16x1xf32>
    %127 = vector.shape_cast %126 : vector<1x16x1xf32> to vector<16x1xf32>
    %128 = vector.broadcast %127 : vector<16x1xf32> to vector<16x128xf32>
    %129 = arith.addf %125, %128 : vector<16x128xf32>
    %cst_60 = arith.constant 5.000000e-01 : f32
    %130 = vector.broadcast %cst_60 : f32 to vector<16x128xf32>
    %131 = arith.mulf %130, %129 : vector<16x128xf32>
    %132 = math.tanh %131 : vector<16x128xf32>
    %cst_61 = arith.constant 5.000000e-01 : f32
    %133 = vector.broadcast %cst_61 : f32 to vector<16x128xf32>
    %134 = arith.mulf %133, %132 : vector<16x128xf32>
    %cst_62 = arith.constant 5.000000e-01 : f32
    %135 = vector.broadcast %cst_62 : f32 to vector<16x128xf32>
    %136 = arith.addf %134, %135 : vector<16x128xf32>
    %137 = arith.mulf %129, %136 : vector<16x128xf32>
    %138 = vector.extract_strided_slice %137 {offsets = [0, 0], sizes = [8, 128], strides = [1, 1]} : vector<16x128xf32> to vector<8x128xf32>
    %139 = vector.extract_strided_slice %137 {offsets = [8, 0], sizes = [8, 128], strides = [1, 1]} : vector<16x128xf32> to vector<8x128xf32>
    %c1_i32_63 = arith.constant 1 : i32
    %140 = tpu.dynamic_rotate %138 by %c1_i32_63 dim 1 : vector<8x128xf32>, i32 -> vector<8x128xf32>
    %141 = arith.mulf %140, %21 : vector<8x128xf32>
    %c127_i32_64 = arith.constant 127 : i32
    %142 = tpu.dynamic_rotate %138 by %c127_i32_64 dim 1 : vector<8x128xf32>, i32 -> vector<8x128xf32>
    %143 = arith.mulf %142, %25 : vector<8x128xf32>
    %144 = tpu.concatenate %141, %138, %143 in 0 : vector<8x128xf32>, vector<8x128xf32>, vector<8x128xf32> -> vector<24x128xf32>
    %c2_65 = arith.constant 2 : index
    %c0_66 = arith.constant 0 : index
    %c0_67 = arith.constant 0 : index
    %145 = vector.load %arg6[%c2_65, %c0_66, %c0_67] : memref<4x8x24xbf16, #tpu.memory_space<vmem>>, vector<1x8x24xbf16>
    %146 = vector.shape_cast %145 : vector<1x8x24xbf16> to vector<8x24xbf16>
    %147 = arith.truncf %144 : vector<24x128xf32> to vector<24x128xbf16>
    %cst_68 = arith.constant dense<0.000000e+00> : vector<8x128xf32>
    %148 = tpu.matmul %146, %147, %cst_68 {dimension_numbers = #tpu.dot_dimension_numbers<[1], [0], [0], [1], [0, 0, 1, 1], [], []>} : vector<8x24xbf16>, vector<24x128xbf16>, vector<8x128xf32> -> vector<8x128xf32>
    %c2_69 = arith.constant 2 : index
    %c0_70 = arith.constant 0 : index
    %c0_71 = arith.constant 0 : index
    %149 = vector.load %arg7[%c2_69, %c0_70, %c0_71] : memref<4x8x1xf32, #tpu.memory_space<vmem>>, vector<1x8x1xf32>
    %150 = vector.shape_cast %149 : vector<1x8x1xf32> to vector<8x1xf32>
    %151 = vector.broadcast %150 : vector<8x1xf32> to vector<8x128xf32>
    %152 = arith.addf %148, %151 : vector<8x128xf32>
    %cst_72 = arith.constant 5.000000e-01 : f32
    %153 = vector.broadcast %cst_72 : f32 to vector<8x128xf32>
    %154 = arith.mulf %153, %152 : vector<8x128xf32>
    %155 = math.tanh %154 : vector<8x128xf32>
    %cst_73 = arith.constant 5.000000e-01 : f32
    %156 = vector.broadcast %cst_73 : f32 to vector<8x128xf32>
    %157 = arith.mulf %156, %155 : vector<8x128xf32>
    %cst_74 = arith.constant 5.000000e-01 : f32
    %158 = vector.broadcast %cst_74 : f32 to vector<8x128xf32>
    %159 = arith.addf %157, %158 : vector<8x128xf32>
    %160 = arith.mulf %152, %159 : vector<8x128xf32>
    %161 = arith.addf %160, %139 : vector<8x128xf32>
    %c3 = arith.constant 3 : index
    %c0_75 = arith.constant 0 : index
    %c0_76 = arith.constant 0 : index
    %162 = vector.load %arg4[%c3, %c0_75, %c0_76] : memref<4x16x8xbf16, #tpu.memory_space<vmem>>, vector<1x16x8xbf16>
    %163 = vector.shape_cast %162 : vector<1x16x8xbf16> to vector<16x8xbf16>
    %164 = arith.truncf %161 : vector<8x128xf32> to vector<8x128xbf16>
    %cst_77 = arith.constant dense<0.000000e+00> : vector<16x128xf32>
    %165 = tpu.matmul %163, %164, %cst_77 {dimension_numbers = #tpu.dot_dimension_numbers<[1], [0], [0], [1], [0, 0, 1, 1], [], []>} : vector<16x8xbf16>, vector<8x128xbf16>, vector<16x128xf32> -> vector<16x128xf32>
    %c3_78 = arith.constant 3 : index
    %c0_79 = arith.constant 0 : index
    %c0_80 = arith.constant 0 : index
    %166 = vector.load %arg5[%c3_78, %c0_79, %c0_80] : memref<4x16x1xf32, #tpu.memory_space<vmem>>, vector<1x16x1xf32>
    %167 = vector.shape_cast %166 : vector<1x16x1xf32> to vector<16x1xf32>
    %168 = vector.broadcast %167 : vector<16x1xf32> to vector<16x128xf32>
    %169 = arith.addf %165, %168 : vector<16x128xf32>
    %cst_81 = arith.constant 5.000000e-01 : f32
    %170 = vector.broadcast %cst_81 : f32 to vector<16x128xf32>
    %171 = arith.mulf %170, %169 : vector<16x128xf32>
    %172 = math.tanh %171 : vector<16x128xf32>
    %cst_82 = arith.constant 5.000000e-01 : f32
    %173 = vector.broadcast %cst_82 : f32 to vector<16x128xf32>
    %174 = arith.mulf %173, %172 : vector<16x128xf32>
    %cst_83 = arith.constant 5.000000e-01 : f32
    %175 = vector.broadcast %cst_83 : f32 to vector<16x128xf32>
    %176 = arith.addf %174, %175 : vector<16x128xf32>
    %177 = arith.mulf %169, %176 : vector<16x128xf32>
    %178 = vector.extract_strided_slice %177 {offsets = [0, 0], sizes = [8, 128], strides = [1, 1]} : vector<16x128xf32> to vector<8x128xf32>
    %179 = vector.extract_strided_slice %177 {offsets = [8, 0], sizes = [8, 128], strides = [1, 1]} : vector<16x128xf32> to vector<8x128xf32>
    %c1_i32_84 = arith.constant 1 : i32
    %180 = tpu.dynamic_rotate %178 by %c1_i32_84 dim 1 : vector<8x128xf32>, i32 -> vector<8x128xf32>
    %181 = arith.mulf %180, %21 : vector<8x128xf32>
    %c127_i32_85 = arith.constant 127 : i32
    %182 = tpu.dynamic_rotate %178 by %c127_i32_85 dim 1 : vector<8x128xf32>, i32 -> vector<8x128xf32>
    %183 = arith.mulf %182, %25 : vector<8x128xf32>
    %184 = tpu.concatenate %181, %178, %183 in 0 : vector<8x128xf32>, vector<8x128xf32>, vector<8x128xf32> -> vector<24x128xf32>
    %c3_86 = arith.constant 3 : index
    %c0_87 = arith.constant 0 : index
    %c0_88 = arith.constant 0 : index
    %185 = vector.load %arg6[%c3_86, %c0_87, %c0_88] : memref<4x8x24xbf16, #tpu.memory_space<vmem>>, vector<1x8x24xbf16>
    %186 = vector.shape_cast %185 : vector<1x8x24xbf16> to vector<8x24xbf16>
    %187 = arith.truncf %184 : vector<24x128xf32> to vector<24x128xbf16>
    %cst_89 = arith.constant dense<0.000000e+00> : vector<8x128xf32>
    %188 = tpu.matmul %186, %187, %cst_89 {dimension_numbers = #tpu.dot_dimension_numbers<[1], [0], [0], [1], [0, 0, 1, 1], [], []>} : vector<8x24xbf16>, vector<24x128xbf16>, vector<8x128xf32> -> vector<8x128xf32>
    %c3_90 = arith.constant 3 : index
    %c0_91 = arith.constant 0 : index
    %c0_92 = arith.constant 0 : index
    %189 = vector.load %arg7[%c3_90, %c0_91, %c0_92] : memref<4x8x1xf32, #tpu.memory_space<vmem>>, vector<1x8x1xf32>
    %190 = vector.shape_cast %189 : vector<1x8x1xf32> to vector<8x1xf32>
    %191 = vector.broadcast %190 : vector<8x1xf32> to vector<8x128xf32>
    %192 = arith.addf %188, %191 : vector<8x128xf32>
    %cst_93 = arith.constant 5.000000e-01 : f32
    %193 = vector.broadcast %cst_93 : f32 to vector<8x128xf32>
    %194 = arith.mulf %193, %192 : vector<8x128xf32>
    %195 = math.tanh %194 : vector<8x128xf32>
    %cst_94 = arith.constant 5.000000e-01 : f32
    %196 = vector.broadcast %cst_94 : f32 to vector<8x128xf32>
    %197 = arith.mulf %196, %195 : vector<8x128xf32>
    %cst_95 = arith.constant 5.000000e-01 : f32
    %198 = vector.broadcast %cst_95 : f32 to vector<8x128xf32>
    %199 = arith.addf %197, %198 : vector<8x128xf32>
    %200 = arith.mulf %192, %199 : vector<8x128xf32>
    %201 = arith.addf %200, %179 : vector<8x128xf32>
    %202 = arith.addf %201, %40 : vector<8x128xf32>
    %203 = tpu.concatenate %202, %41 in 0 : vector<8x128xf32>, vector<8x128xf32> -> vector<16x128xf32>
    %c0_96 = arith.constant 0 : index
    %c0_97 = arith.constant 0 : index
    %204 = vector.load %arg8[%c0_96, %c0_97] : memref<16x16xbf16, #tpu.memory_space<vmem>>, vector<16x16xbf16>
    %205 = arith.truncf %203 : vector<16x128xf32> to vector<16x128xbf16>
    %cst_98 = arith.constant dense<0.000000e+00> : vector<16x128xf32>
    %206 = tpu.matmul %204, %205, %cst_98 {dimension_numbers = #tpu.dot_dimension_numbers<[1], [0], [0], [1], [0, 0, 1, 1], [], []>} : vector<16x16xbf16>, vector<16x128xbf16>, vector<16x128xf32> -> vector<16x128xf32>
    %c0_99 = arith.constant 0 : index
    %c0_100 = arith.constant 0 : index
    %207 = vector.load %arg9[%c0_99, %c0_100] : memref<16x1xf32, #tpu.memory_space<vmem>>, vector<16x1xf32>
    %208 = vector.broadcast %207 : vector<16x1xf32> to vector<16x128xf32>
    %209 = arith.addf %206, %208 : vector<16x128xf32>
    %cst_101 = arith.constant 5.000000e-01 : f32
    %210 = vector.broadcast %cst_101 : f32 to vector<16x128xf32>
    %211 = arith.mulf %210, %209 : vector<16x128xf32>
    %212 = math.tanh %211 : vector<16x128xf32>
    %cst_102 = arith.constant 5.000000e-01 : f32
    %213 = vector.broadcast %cst_102 : f32 to vector<16x128xf32>
    %214 = arith.mulf %213, %212 : vector<16x128xf32>
    %cst_103 = arith.constant 5.000000e-01 : f32
    %215 = vector.broadcast %cst_103 : f32 to vector<16x128xf32>
    %216 = arith.addf %214, %215 : vector<16x128xf32>
    %217 = arith.mulf %209, %216 : vector<16x128xf32>
    %c0_104 = arith.constant 0 : index
    %c0_105 = arith.constant 0 : index
    %218 = vector.load %arg10[%c0_104, %c0_105] : memref<16x128xf32, #tpu.memory_space<vmem>>, vector<16x128xf32>
    tpu.vector_store %arg10[%c0_104, %c0_105], %217 {strides = array<i32>} : memref<16x128xf32, #tpu.memory_space<vmem>>, vector<16x128xf32>,
    return
  }
  func.func @transform_0(%arg0: i32) -> (i32, i32) {
    %c0_i32 = arith.constant 0 : i32
    %c0_i32_0 = arith.constant 0 : i32
    return %c0_i32, %arg0 : i32, i32
  }
  func.func @transform_1(%arg0: i32) -> (i32, i32) {
    %c0_i32 = arith.constant 0 : i32
    %c0_i32_0 = arith.constant 0 : i32
    %c0_i32_1 = arith.constant 0 : i32
    return %c0_i32, %c0_i32_0 : i32, i32
  }
  func.func @transform_2(%arg0: i32) -> (i32, i32) {
    %c0_i32 = arith.constant 0 : i32
    %c0_i32_0 = arith.constant 0 : i32
    %c0_i32_1 = arith.constant 0 : i32
    return %c0_i32, %c0_i32_0 : i32, i32
  }
  func.func @transform_3(%arg0: i32) -> (i32, i32, i32) {
    %c0_i32 = arith.constant 0 : i32
    %c0_i32_0 = arith.constant 0 : i32
    %c0_i32_1 = arith.constant 0 : i32
    %c0_i32_2 = arith.constant 0 : i32
    return %c0_i32, %c0_i32_0, %c0_i32_1 : i32, i32, i32
  }
  func.func @transform_4(%arg0: i32) -> (i32, i32, i32) {
    %c0_i32 = arith.constant 0 : i32
    %c0_i32_0 = arith.constant 0 : i32
    %c0_i32_1 = arith.constant 0 : i32
    %c0_i32_2 = arith.constant 0 : i32
    return %c0_i32, %c0_i32_0, %c0_i32_1 : i32, i32, i32
  }
  func.func @transform_5(%arg0: i32) -> (i32, i32, i32) {
    %c0_i32 = arith.constant 0 : i32
    %c0_i32_0 = arith.constant 0 : i32
    %c0_i32_1 = arith.constant 0 : i32
    %c0_i32_2 = arith.constant 0 : i32
    return %c0_i32, %c0_i32_0, %c0_i32_1 : i32, i32, i32
  }
  func.func @transform_6(%arg0: i32) -> (i32, i32, i32) {
    %c0_i32 = arith.constant 0 : i32
    %c0_i32_0 = arith.constant 0 : i32
    %c0_i32_1 = arith.constant 0 : i32
    %c0_i32_2 = arith.constant 0 : i32
    return %c0_i32, %c0_i32_0, %c0_i32_1 : i32, i32, i32
  }
  func.func @transform_7(%arg0: i32) -> (i32, i32) {
    %c0_i32 = arith.constant 0 : i32
    %c0_i32_0 = arith.constant 0 : i32
    %c0_i32_1 = arith.constant 0 : i32
    return %c0_i32, %c0_i32_0 : i32, i32
  }
  func.func @transform_8(%arg0: i32) -> (i32, i32) {
    %c0_i32 = arith.constant 0 : i32
    %c0_i32_0 = arith.constant 0 : i32
    %c0_i32_1 = arith.constant 0 : i32
    return %c0_i32, %c0_i32_0 : i32, i32
  }
  func.func @transform_9(%arg0: i32) -> (i32, i32) {
    %c0_i32 = arith.constant 0 : i32
    %c0_i32_0 = arith.constant 0 : i32
    return %c0_i32, %arg0 : i32, i32
  }
}

</mosaic_0001>

<llo_original>
// kernel: tpu_custom_call.1
$region0: #{tpu_custom_call.1}
  #allocation0 [shape = 'u32[]', space=smem, size = 0x4, offset = 0x4, fixed_abs, tag = 'smem constant byte address 0x4 - core index']
  #allocation1 [shape = 'u32[144,128]{1,0:T(1,128)}', space=vmem, size = 0x12000, scoped, tag = 'internal scratch']
  %s0 = inlined_call_operand.vmem [shape: f32[16,128], index: 0, kind: input, shape index: {}]
  %s1 = inlined_call_operand.vmem [shape: bf16[16,16], index: 1, kind: input, shape index: {}]
  %s2 = inlined_call_operand.vmem [shape: f32[16,1], index: 2, kind: input, shape index: {}]
  %s3 = inlined_call_operand.vmem [shape: bf16[4,16,8], index: 3, kind: input, shape index: {}]
  %s4 = inlined_call_operand.vmem [shape: f32[4,16,1], index: 4, kind: input, shape index: {}]
  %s5 = inlined_call_operand.vmem [shape: bf16[4,8,24], index: 5, kind: input, shape index: {}]
  %s6 = inlined_call_operand.vmem [shape: f32[4,8,1], index: 6, kind: input, shape index: {}]
  %s7 = inlined_call_operand.vmem [shape: bf16[16,16], index: 7, kind: input, shape index: {}]
  %s8 = inlined_call_operand.vmem [shape: f32[16,1], index: 8, kind: input, shape index: {}]
  %s9 = inlined_call_operand.hbm [shape: f32[16,128], index: 9, kind: output, shape index: {}]
  %s10 = sld [smem:[#allocation0]]
  $region46: #{tpu_custom_call.1} parent=0
    _
  %s12 = ssub.s32 1, %s10
  %s13 = scalar_select 0, %s12, %s10
  $region1: #{tpu_custom_call.1} parent=0
    #allocation2 [shape = 'u8[8192]{0}', space=vmem, size = 0x2000, scoped, tag = 'output window, operand 0, single buffered']
    #allocation3 [shape = 's32[1]{0}', space=sflag, size = 0x4, scoped, tag = 'scoped memory for tpu_custom_call.1']
    %14 = vsyncpa [#allocation3], 0
    // Predicated region
    $region2: #{tpu_custom_call.1} parent=1 // pred_check
      _
    $region3: #{tpu_custom_call.1} parent=1 // pred_check_branch
      %16 = sbr.rel (0) target = $region5
    $region4: #{tpu_custom_call.1} parent=1 // pred_region
      _
    $region5: #{tpu_custom_call.1} parent=1 // pred_fallthru
      _
    // Predicated region
    $region6: #{tpu_custom_call.1} parent=1 // pred_check
      _
    $region7: #{tpu_custom_call.1} parent=1 // pred_check_branch
      %18 = sbr.rel (0) target = $region9
    $region8: #{tpu_custom_call.1} parent=1 // pred_region
      _
    $region9: #{tpu_custom_call.1} parent=1 // pred_fallthru
      _
    // Predicated region
    $region10: #{tpu_custom_call.1} parent=1 // pred_check
      _
    $region11: #{tpu_custom_call.1} parent=1 // pred_check_branch
      %20 = sbr.rel (0) target = $region13
    $region12: #{tpu_custom_call.1} parent=1 // pred_region
      _
    $region13: #{tpu_custom_call.1} parent=1 // pred_fallthru
      _
    // Predicated region
    $region14: #{tpu_custom_call.1} parent=1 // pred_check
      _
    $region15: #{tpu_custom_call.1} parent=1 // pred_check_branch
      %22 = sbr.rel (0) target = $region17
    $region16: #{tpu_custom_call.1} parent=1 // pred_region
      _
    $region17: #{tpu_custom_call.1} parent=1 // pred_fallthru
      _
    // Predicated region
    $region18: #{tpu_custom_call.1} parent=1 // pred_check
      _
    $region19: #{tpu_custom_call.1} parent=1 // pred_check_branch
      %24 = sbr.rel (0) target = $region21
    $region20: #{tpu_custom_call.1} parent=1 // pred_region
      _
    $region21: #{tpu_custom_call.1} parent=1 // pred_fallthru
      _
    // Predicated region
    $region22: #{tpu_custom_call.1} parent=1 // pred_check
      _
    $region23: #{tpu_custom_call.1} parent=1 // pred_check_branch
      %26 = sbr.rel (0) target = $region25
    $region24: #{tpu_custom_call.1} parent=1 // pred_region
      _
    $region25: #{tpu_custom_call.1} parent=1 // pred_fallthru
      _
    // Predicated region
    $region26: #{tpu_custom_call.1} parent=1 // pred_check
      _
    $region27: #{tpu_custom_call.1} parent=1 // pred_check_branch
      %28 = sbr.rel (0) target = $region29
    $region28: #{tpu_custom_call.1} parent=1 // pred_region
      _
    $region29: #{tpu_custom_call.1} parent=1 // pred_fallthru
      _
    // Predicated region
    $region30: #{tpu_custom_call.1} parent=1 // pred_check
      _
    $region31: #{tpu_custom_call.1} parent=1 // pred_check_branch
      %30 = sbr.rel (0) target = $region33
    $region32: #{tpu_custom_call.1} parent=1 // pred_region
      _
    $region33: #{tpu_custom_call.1} parent=1 // pred_fallthru
      _
    // Predicated region
    $region34: #{tpu_custom_call.1} parent=1 // pred_check
      _
    $region35: #{tpu_custom_call.1} parent=1 // pred_check_branch
      %32 = sbr.rel (0) target = $region37
    $region36: #{tpu_custom_call.1} parent=1 // pred_region
      _
    $region37: #{tpu_custom_call.1} parent=1 // pred_fallthru
      _
    %v34 = vld [vmem:[%s0] sm:$0xff]
    %v35 = vld [vmem:[%s0 + $0x8] sm:$0xff]
    %v36 = vlaneseq
    %v37 = vand.u32 %v36, 127
    %vm38 = vcmp.lt.s32.totalorder %v37, 0
    %v39 = vsub.s32 0, %v37
    %v40 = vsel %vm38, %v39, %v37
    %v41 = vshrl.u32 %v40, 5
    %v42 = vand.u32 %v40, 31
    %v43 = vsub.s32 0, %v42
    %v44 = vsel %vm38, %v43, %v42
    %vm45 = vcmp.ne.s32.totalorder %v44, 0
    %vm46 = vcmp.lt.s32.totalorder %v44, 0
    %vm47 = vmand %vm46, %vm45
    %v48 = vadd.s32 %v44, 32
    %v49 = vsel %vm47, %v48, %v44
    %vm50 = vcmp.ne.s32.totalorder %v49, 0
    %v51 = vsel %vm50, 1, 0
    %v52 = vcvt.s32.f32 %v51
    %vm53 = vcmp.ne.s32.totalorder %v49, 31
    %v54 = vsel %vm53, 1, 0
    %v55 = vcvt.s32.f32 %v54
    %v56 = vld [vmem:[%s1] sm:$0xf]
    %v57 = vld [vmem:[%s1 + $0x4] sm:$0xf]
    %v58 = vpack.c.bf16 %v35, %v34
    %v59 = vld [vmem:[%s2] sm:$0xff]
    %v60 = vld [vmem:[%s2 + $0x8] sm:$0xff]
    %62 = vset.pattern.permute.xlu0 0
    %63 = vperm.xlu0 %62, %v59
    %v64 = vpop.permute.xlu0 %63
    %67 = vset.pattern.permute.xlu0 0
    %68 = vperm.xlu0 %67, %v60
    %v69 = vpop.permute.xlu0 %68
    %v73 = vunpack.c.l.b16 %v56
    %v74 = vunpack.c.l.b16 %v57
    %v75 = vpack.c.b16 %v74, %v73
    %vm76 = vcmask 130048
    %v78 = vsel %vm76, %v75, 0
    %80 = vmatprep.subr.bf16.mxu0 0
    %81 = vmatpush1.bf16.msra.mxu0 %v58
    %82 = vmatprep.subr.bf16.mxu0 0
    %83 = vmatpush1.bf16.msra.mxu0 0
    %84 = vmatprep.subr.bf16.mxu0 0
    %85 = vmatpush1.bf16.msra.mxu0 0
    %86 = vmatprep.subr.bf16.mxu0 0
    %87 = vmatpush1.bf16.msra.mxu0 0
    %88 = vmatprep.subr.bf16.mxu0 0
    %89 = vmatpush1.bf16.msra.mxu0 0
    %90 = vmatprep.subr.bf16.mxu0 0
    %91 = vmatpush1.bf16.msra.mxu0 0
    %92 = vmatprep.subr.bf16.mxu0 0
    %93 = vmatpush1.bf16.msra.mxu0 0
    %94 = vmatprep.subr.bf16.mxu0 0
    %95 = vmatpush1.bf16.msra.mxu0 0
    %96 = vmatprep.subr.bf16.mxu0 0
    %97 = vmatpush1.bf16.msra.mxu0 0
    %98 = vmatprep.subr.bf16.mxu0 0
    %99 = vmatpush1.bf16.msra.mxu0 0
    %100 = vmatprep.subr.bf16.mxu0 0
    %101 = vmatpush1.bf16.msra.mxu0 0
    %102 = vmatprep.subr.bf16.mxu0 0
    %103 = vmatpush1.bf16.msra.mxu0 0
    %104 = vmatprep.subr.bf16.mxu0 0
    %105 = vmatpush1.bf16.msra.mxu0 0
    %106 = vmatprep.subr.bf16.mxu0 0
    %107 = vmatpush1.bf16.msra.mxu0 0
    %108 = vmatprep.subr.bf16.mxu0 0
    %109 = vmatpush1.bf16.msra.mxu0 0
    %110 = vmatprep.subr.bf16.mxu0 0
    %111 = vmatpush1.bf16.msra.mxu0 0
    %112 = vmatprep.mubr.bf16.mxu0 0
    %113 = vmatmul.mubr.bf16.gmra.mrb[0].mxu0 %v78
    %v114 = vpop.f32.mrb[0].mxu0
    %v115 = vadd.f32 %v64, %v114
    %v116 = vpop.f32.mrb[0].mxu0
    %v117 = vpop.f32.mrb[0].mxu0
    %v118 = vadd.f32 %v69, %v117
    %v119 = vpop.f32.mrb[0].mxu0
    %120 = vdwg.mxu0
    %v121 = vmul.f32 %v115, 0.5
    %v122 = vmul.f32 %v118, 0.5
    %v123 = vtanh.pop %v121
    %v124 = vtanh.pop %v122
    %v125 = vmul.f32 %v123, 0.5
    %v126 = vmul.f32 %v124, 0.5
    %v127 = vadd.f32 %v125, 0.5
    %v128 = vadd.f32 %v126, 0.5
    %v129 = vmul.f32 %v115, %v127
    %v130 = vmul.f32 %v118, %v128
    %v131 = vld [vmem:[%s3] sm:$0xf]
    %v132 = vld [vmem:[%s3 + $0x4] sm:$0xf]
    %v133 = vpack.c.bf16 %v129, %v129
    %v134 = vld [vmem:[%s4] sm:$0xff]
    %v135 = vld [vmem:[%s4 + $0x8] sm:$0xff]
    %137 = vset.pattern.permute.xlu0 0
    %138 = vperm.xlu0 %137, %v134
    %v139 = vpop.permute.xlu0 %138
    %142 = vset.pattern.permute.xlu0 0
    %143 = vperm.xlu0 %142, %v135
    %v144 = vpop.permute.xlu0 %143
    %v148 = vunpack.c.l.b16 %v131
    %v149 = vunpack.c.l.b16 %v132
    %v150 = vpack.c.b16 %v149, %v148
    %vm151 = vcmask 64512
    %v153 = vsel %vm151, %v150, 0
    %vm155 = vcmask 1043456
    %v157 = vsel %vm155, %v133, 0
    %159 = vmatprep.subr.bf16.mxu0 0
    %160 = vmatpush1.bf16.msra.mxu0 %v157
    %161 = vmatprep.subr.bf16.mxu0 0
    %162 = vmatpush1.bf16.msra.mxu0 0
    %163 = vmatprep.subr.bf16.mxu0 0
    %164 = vmatpush1.bf16.msra.mxu0 0
    %165 = vmatprep.subr.bf16.mxu0 0
    %166 = vmatpush1.bf16.msra.mxu0 0
    %167 = vmatprep.subr.bf16.mxu0 0
    %168 = vmatpush1.bf16.msra.mxu0 0
    %169 = vmatprep.subr.bf16.mxu0 0
    %170 = vmatpush1.bf16.msra.mxu0 0
    %171 = vmatprep.subr.bf16.mxu0 0
    %172 = vmatpush1.bf16.msra.mxu0 0
    %173 = vmatprep.subr.bf16.mxu0 0
    %174 = vmatpush1.bf16.msra.mxu0 0
    %175 = vmatprep.subr.bf16.mxu0 0
    %176 = vmatpush1.bf16.msra.mxu0 0
    %177 = vmatprep.subr.bf16.mxu0 0
    %178 = vmatpush1.bf16.msra.mxu0 0
    %179 = vmatprep.subr.bf16.mxu0 0
    %180 = vmatpush1.bf16.msra.mxu0 0
    %181 = vmatprep.subr.bf16.mxu0 0
    %182 = vmatpush1.bf16.msra.mxu0 0
    %183 = vmatprep.subr.bf16.mxu0 0
    %184 = vmatpush1.bf16.msra.mxu0 0
    %185 = vmatprep.subr.bf16.mxu0 0
    %186 = vmatpush1.bf16.msra.mxu0 0
    %187 = vmatprep.subr.bf16.mxu0 0
    %188 = vmatpush1.bf16.msra.mxu0 0
    %189 = vmatprep.subr.bf16.mxu0 0
    %190 = vmatpush1.bf16.msra.mxu0 0
    %191 = vmatprep.mubr.bf16.mxu0 0
    %192 = vmatmul.mubr.bf16.gmra.mrb[0].mxu0 %v153
    %v193 = vpop.f32.mrb[0].mxu0
    %v194 = vadd.f32 %v139, %v193
    %v195 = vpop.f32.mrb[0].mxu0
    %v196 = vpop.f32.mrb[0].mxu0
    %v197 = vadd.f32 %v144, %v196
    %v198 = vpop.f32.mrb[0].mxu0
    %199 = vdwg.mxu0
    %v200 = vmul.f32 %v194, 0.5
    %v201 = vmul.f32 %v197, 0.5
    %v202 = vtanh.pop %v200
    %v203 = vtanh.pop %v201
    %v204 = vmul.f32 %v202, 0.5
    %v205 = vmul.f32 %v203, 0.5
    %v206 = vadd.f32 %v204, 0.5
    %v207 = vadd.f32 %v205, 0.5
    %v208 = vmul.f32 %v194, %v206
    %v209 = vmul.f32 %v197, %v207
    %210 = vrot.lane.b32.xlu0 %v208, 1
    %v211 = vpop.permute.xlu0 %210
    %v212 = vmul.f32 %v211, %v52
    %213 = vrot.lane.b32.xlu0 %v208, 127
    %v214 = vpop.permute.xlu0 %213
    %v215 = vmul.f32 %v214, %v55
    %v216 = vld [vmem:[%s5] sm:$0xf]
    %v217 = vpack.c.bf16 %v208, %v212
    %v218 = vpack.c.bf16 %v215, %v215
    %v219 = vld [vmem:[%s6] sm:$0xff]
    %221 = vset.pattern.permute.xlu0 0
    %222 = vperm.xlu0 %221, %v219
    %v223 = vpop.permute.xlu0 %222
    %vm225 = vcmask 195584
    %v227 = vsel %vm225, %v216, 0
    %v230 = vsel %vm155, %v218, 0
    %232 = vmatprep.subr.bf16.mxu0 0
    %233 = vmatpush1.bf16.msra.mxu0 %v217
    %234 = vmatprep.subr.bf16.mxu0 0
    %235 = vmatpush1.bf16.msra.mxu0 %v230
    %236 = vmatprep.subr.bf16.mxu0 0
    %237 = vmatpush1.bf16.msra.mxu0 0
    %238 = vmatprep.subr.bf16.mxu0 0
    %239 = vmatpush1.bf16.msra.mxu0 0
    %240 = vmatprep.subr.bf16.mxu0 0
    %241 = vmatpush1.bf16.msra.mxu0 0
    %242 = vmatprep.subr.bf16.mxu0 0
    %243 = vmatpush1.bf16.msra.mxu0 0
    %244 = vmatprep.subr.bf16.mxu0 0
    %245 = vmatpush1.bf16.msra.mxu0 0
    %246 = vmatprep.subr.bf16.mxu0 0
    %247 = vmatpush1.bf16.msra.mxu0 0
    %248 = vmatprep.subr.bf16.mxu0 0
    %249 = vmatpush1.bf16.msra.mxu0 0
    %250 = vmatprep.subr.bf16.mxu0 0
    %251 = vmatpush1.bf16.msra.mxu0 0
    %252 = vmatprep.subr.bf16.mxu0 0
    %253 = vmatpush1.bf16.msra.mxu0 0
    %254 = vmatprep.subr.bf16.mxu0 0
    %255 = vmatpush1.bf16.msra.mxu0 0
    %256 = vmatprep.subr.bf16.mxu0 0
    %257 = vmatpush1.bf16.msra.mxu0 0
    %258 = vmatprep.subr.bf16.mxu0 0
    %259 = vmatpush1.bf16.msra.mxu0 0
    %260 = vmatprep.subr.bf16.mxu0 0
    %261 = vmatpush1.bf16.msra.mxu0 0
    %262 = vmatprep.subr.bf16.mxu0 0
    %263 = vmatpush1.bf16.msra.mxu0 0
    %264 = vmatprep.mubr.bf16.mxu0 0
    %265 = vmatmul.mubr.bf16.gmra.mrb[0].mxu0 %v227
    %v266 = vpop.f32.mrb[0].mxu0
    %v267 = vadd.f32 %v223, %v266
    %v268 = vpop.f32.mrb[0].mxu0
    %v269 = vpop.f32.mrb[0].mxu0
    %v270 = vpop.f32.mrb[0].mxu0
    %271 = vdwg.mxu0
    %v272 = vmul.f32 %v267, 0.5
    %v273 = vtanh.pop %v272
    %v274 = vmul.f32 %v273, 0.5
    %v275 = vadd.f32 %v274, 0.5
    %v276 = vmul.f32 %v267, %v275
    %v277 = vadd.f32 %v276, %v209
    %s278 = scalar_lea.vmem %s3, 8
    %v279 = vld [vmem:[%s278] sm:$0xf]
    %v280 = vld [vmem:[%s278 + $0x4] sm:$0xf]
    %v281 = vpack.c.bf16 %v277, %v277
    %s282 = scalar_lea.vmem %s4, 16
    %v283 = vld [vmem:[%s282] sm:$0xff]
    %v284 = vld [vmem:[%s282 + $0x8] sm:$0xff]
    %286 = vset.pattern.permute.xlu0 0
    %287 = vperm.xlu0 %286, %v283
    %v288 = vpop.permute.xlu0 %287
    %291 = vset.pattern.permute.xlu0 0
    %292 = vperm.xlu0 %291, %v284
    %v293 = vpop.permute.xlu0 %292
    %v297 = vunpack.c.l.b16 %v279
    %v298 = vunpack.c.l.b16 %v280
    %v299 = vpack.c.b16 %v298, %v297
    %v301 = vsel %vm151, %v299, 0
    %v304 = vsel %vm155, %v281, 0
    %306 = vmatprep.subr.bf16.mxu0 0
    %307 = vmatpush1.bf16.msra.mxu0 %v304
    %308 = vmatprep.subr.bf16.mxu0 0
    %309 = vmatpush1.bf16.msra.mxu0 0
    %310 = vmatprep.subr.bf16.mxu0 0
    %311 = vmatpush1.bf16.msra.mxu0 0
    %312 = vmatprep.subr.bf16.mxu0 0
    %313 = vmatpush1.bf16.msra.mxu0 0
    %314 = vmatprep.subr.bf16.mxu0 0
    %315 = vmatpush1.bf16.msra.mxu0 0
    %316 = vmatprep.subr.bf16.mxu0 0
    %317 = vmatpush1.bf16.msra.mxu0 0
    %318 = vmatprep.subr.bf16.mxu0 0
    %319 = vmatpush1.bf16.msra.mxu0 0
    %320 = vmatprep.subr.bf16.mxu0 0
    %321 = vmatpush1.bf16.msra.mxu0 0
    %322 = vmatprep.subr.bf16.mxu0 0
    %323 = vmatpush1.bf16.msra.mxu0 0
    %324 = vmatprep.subr.bf16.mxu0 0
    %325 = vmatpush1.bf16.msra.mxu0 0
    %326 = vmatprep.subr.bf16.mxu0 0
    %327 = vmatpush1.bf16.msra.mxu0 0
    %328 = vmatprep.subr.bf16.mxu0 0
    %329 = vmatpush1.bf16.msra.mxu0 0
    %330 = vmatprep.subr.bf16.mxu0 0
    %331 = vmatpush1.bf16.msra.mxu0 0
    %332 = vmatprep.subr.bf16.mxu0 0
    %333 = vmatpush1.bf16.msra.mxu0 0
    %334 = vmatprep.subr.bf16.mxu0 0
    %335 = vmatpush1.bf16.msra.mxu0 0
    %336 = vmatprep.subr.bf16.mxu0 0
    %337 = vmatpush1.bf16.msra.mxu0 0
    %338 = vmatprep.mubr.bf16.mxu0 0
    %339 = vmatmul.mubr.bf16.gmra.mrb[0].mxu0 %v301
    %v340 = vpop.f32.mrb[0].mxu0
    %v341 = vadd.f32 %v288, %v340
    %v342 = vpop.f32.mrb[0].mxu0
    %v343 = vpop.f32.mrb[0].mxu0
    %v344 = vadd.f32 %v293, %v343
    %v345 = vpop.f32.mrb[0].mxu0
    %346 = vdwg.mxu0
    %v347 = vmul.f32 %v341, 0.5
    %v348 = vmul.f32 %v344, 0.5
    %v349 = vtanh.pop %v347
    %v350 = vtanh.pop %v348
    %v351 = vmul.f32 %v349, 0.5
    %v352 = vmul.f32 %v350, 0.5
    %v353 = vadd.f32 %v351, 0.5
    %v354 = vadd.f32 %v352, 0.5
    %v355 = vmul.f32 %v341, %v353
    %v356 = vmul.f32 %v344, %v354
    %357 = vrot.lane.b32.xlu0 %v355, 1
    %v358 = vpop.permute.xlu0 %357
    %v359 = vmul.f32 %v358, %v52
    %360 = vrot.lane.b32.xlu0 %v355, 127
    %v361 = vpop.permute.xlu0 %360
    %v362 = vmul.f32 %v361, %v55
    %s363 = scalar_lea.vmem %s5, 4
    %v364 = vld [vmem:[%s363] sm:$0xf]
    %v365 = vpack.c.bf16 %v355, %v359
    %v366 = vpack.c.bf16 %v362, %v362
    %s367 = scalar_lea.vmem %s6, 8
    %v368 = vld [vmem:[%s367] sm:$0xff]
    %370 = vset.pattern.permute.xlu0 0
    %371 = vperm.xlu0 %370, %v368
    %v372 = vpop.permute.xlu0 %371
    %v375 = vsel %vm225, %v364, 0
    %v378 = vsel %vm155, %v366, 0
    %380 = vmatprep.subr.bf16.mxu0 0
    %381 = vmatpush1.bf16.msra.mxu0 %v365
    %382 = vmatprep.subr.bf16.mxu0 0
    %383 = vmatpush1.bf16.msra.mxu0 %v378
    %384 = vmatprep.subr.bf16.mxu0 0
    %385 = vmatpush1.bf16.msra.mxu0 0
    %386 = vmatprep.subr.bf16.mxu0 0
    %387 = vmatpush1.bf16.msra.mxu0 0
    %388 = vmatprep.subr.bf16.mxu0 0
    %389 = vmatpush1.bf16.msra.mxu0 0
    %390 = vmatprep.subr.bf16.mxu0 0
    %391 = vmatpush1.bf16.msra.mxu0 0
    %392 = vmatprep.subr.bf16.mxu0 0
    %393 = vmatpush1.bf16.msra.mxu0 0
    %394 = vmatprep.subr.bf16.mxu0 0
    %395 = vmatpush1.bf16.msra.mxu0 0
    %396 = vmatprep.subr.bf16.mxu0 0
    %397 = vmatpush1.bf16.msra.mxu0 0
    %398 = vmatprep.subr.bf16.mxu0 0
    %399 = vmatpush1.bf16.msra.mxu0 0
    %400 = vmatprep.subr.bf16.mxu0 0
    %401 = vmatpush1.bf16.msra.mxu0 0
    %402 = vmatprep.subr.bf16.mxu0 0
    %403 = vmatpush1.bf16.msra.mxu0 0
    %404 = vmatprep.subr.bf16.mxu0 0
    %405 = vmatpush1.bf16.msra.mxu0 0
    %406 = vmatprep.subr.bf16.mxu0 0
    %407 = vmatpush1.bf16.msra.mxu0 0
    %408 = vmatprep.subr.bf16.mxu0 0
    %409 = vmatpush1.bf16.msra.mxu0 0
    %410 = vmatprep.subr.bf16.mxu0 0
    %411 = vmatpush1.bf16.msra.mxu0 0
    %412 = vmatprep.mubr.bf16.mxu0 0
    %413 = vmatmul.mubr.bf16.gmra.mrb[0].mxu0 %v375
    %v414 = vpop.f32.mrb[0].mxu0
    %v415 = vadd.f32 %v372, %v414
    %v416 = vpop.f32.mrb[0].mxu0
    %v417 = vpop.f32.mrb[0].mxu0
    %v418 = vpop.f32.mrb[0].mxu0
    %419 = vdwg.mxu0
    %v420 = vmul.f32 %v415, 0.5
    %v421 = vtanh.pop %v420
    %v422 = vmul.f32 %v421, 0.5
    %v423 = vadd.f32 %v422, 0.5
    %v424 = vmul.f32 %v415, %v423
    %v425 = vadd.f32 %v424, %v356
    %s426 = scalar_lea.vmem %s3, 16
    %v427 = vld [vmem:[%s426] sm:$0xf]
    %v428 = vld [vmem:[%s426 + $0x4] sm:$0xf]
    %v429 = vpack.c.bf16 %v425, %v425
    %s430 = scalar_lea.vmem %s4, 32
    %v431 = vld [vmem:[%s430] sm:$0xff]
    %v432 = vld [vmem:[%s430 + $0x8] sm:$0xff]
    %434 = vset.pattern.permute.xlu0 0
    %435 = vperm.xlu0 %434, %v431
    %v436 = vpop.permute.xlu0 %435
    %439 = vset.pattern.permute.xlu0 0
    %440 = vperm.xlu0 %439, %v432
    %v441 = vpop.permute.xlu0 %440
    %v445 = vunpack.c.l.b16 %v427
    %v446 = vunpack.c.l.b16 %v428
    %v447 = vpack.c.b16 %v446, %v445
    %v449 = vsel %vm151, %v447, 0
    %v452 = vsel %vm155, %v429, 0
    %454 = vmatprep.subr.bf16.mxu0 0
    %455 = vmatpush1.bf16.msra.mxu0 %v452
    %456 = vmatprep.subr.bf16.mxu0 0
    %457 = vmatpush1.bf16.msra.mxu0 0
    %458 = vmatprep.subr.bf16.mxu0 0
    %459 = vmatpush1.bf16.msra.mxu0 0
    %460 = vmatprep.subr.bf16.mxu0 0
    %461 = vmatpush1.bf16.msra.mxu0 0
    %462 = vmatprep.subr.bf16.mxu0 0
    %463 = vmatpush1.bf16.msra.mxu0 0
    %464 = vmatprep.subr.bf16.mxu0 0
    %465 = vmatpush1.bf16.msra.mxu0 0
    %466 = vmatprep.subr.bf16.mxu0 0
    %467 = vmatpush1.bf16.msra.mxu0 0
    %468 = vmatprep.subr.bf16.mxu0 0
    %469 = vmatpush1.bf16.msra.mxu0 0
    %470 = vmatprep.subr.bf16.mxu0 0
    %471 = vmatpush1.bf16.msra.mxu0 0
    %472 = vmatprep.subr.bf16.mxu0 0
    %473 = vmatpush1.bf16.msra.mxu0 0
    %474 = vmatprep.subr.bf16.mxu0 0
    %475 = vmatpush1.bf16.msra.mxu0 0
    %476 = vmatprep.subr.bf16.mxu0 0
    %477 = vmatpush1.bf16.msra.mxu0 0
    %478 = vmatprep.subr.bf16.mxu0 0
    %479 = vmatpush1.bf16.msra.mxu0 0
    %480 = vmatprep.subr.bf16.mxu0 0
    %481 = vmatpush1.bf16.msra.mxu0 0
    %482 = vmatprep.subr.bf16.mxu0 0
    %483 = vmatpush1.bf16.msra.mxu0 0
    %484 = vmatprep.subr.bf16.mxu0 0
    %485 = vmatpush1.bf16.msra.mxu0 0
    %486 = vmatprep.mubr.bf16.mxu0 0
    %487 = vmatmul.mubr.bf16.gmra.mrb[0].mxu0 %v449
    %v488 = vpop.f32.mrb[0].mxu0
    %v489 = vadd.f32 %v436, %v488
    %v490 = vpop.f32.mrb[0].mxu0
    %v491 = vpop.f32.mrb[0].mxu0
    %v492 = vadd.f32 %v441, %v491
    %v493 = vpop.f32.mrb[0].mxu0
    %494 = vdwg.mxu0
    %v495 = vmul.f32 %v489, 0.5
    %v496 = vmul.f32 %v492, 0.5
    %v497 = vtanh.pop %v495
    %v498 = vtanh.pop %v496
    %v499 = vmul.f32 %v497, 0.5
    %v500 = vmul.f32 %v498, 0.5
    %v501 = vadd.f32 %v499, 0.5
    %v502 = vadd.f32 %v500, 0.5
    %v503 = vmul.f32 %v489, %v501
    %v504 = vmul.f32 %v492, %v502
    %505 = vrot.lane.b32.xlu0 %v503, 1
    %v506 = vpop.permute.xlu0 %505
    %v507 = vmul.f32 %v506, %v52
    %508 = vrot.lane.b32.xlu0 %v503, 127
    %v509 = vpop.permute.xlu0 %508
    %v510 = vmul.f32 %v509, %v55
    %s511 = scalar_lea.vmem %s5, 8
    %v512 = vld [vmem:[%s511] sm:$0xf]
    %v513 = vpack.c.bf16 %v503, %v507
    %v514 = vpack.c.bf16 %v510, %v510
    %s515 = scalar_lea.vmem %s6, 16
    %v516 = vld [vmem:[%s515] sm:$0xff]
    %518 = vset.pattern.permute.xlu0 0
    %519 = vperm.xlu0 %518, %v516
    %v520 = vpop.permute.xlu0 %519
    %v523 = vsel %vm225, %v512, 0
    %v526 = vsel %vm155, %v514, 0
    %528 = vmatprep.subr.bf16.mxu0 0
    %529 = vmatpush1.bf16.msra.mxu0 %v513
    %530 = vmatprep.subr.bf16.mxu0 0
    %531 = vmatpush1.bf16.msra.mxu0 %v526
    %532 = vmatprep.subr.bf16.mxu0 0
    %533 = vmatpush1.bf16.msra.mxu0 0
    %534 = vmatprep.subr.bf16.mxu0 0
    %535 = vmatpush1.bf16.msra.mxu0 0
    %536 = vmatprep.subr.bf16.mxu0 0
    %537 = vmatpush1.bf16.msra.mxu0 0
    %538 = vmatprep.subr.bf16.mxu0 0
    %539 = vmatpush1.bf16.msra.mxu0 0
    %540 = vmatprep.subr.bf16.mxu0 0
    %541 = vmatpush1.bf16.msra.mxu0 0
    %542 = vmatprep.subr.bf16.mxu0 0
    %543 = vmatpush1.bf16.msra.mxu0 0
    %544 = vmatprep.subr.bf16.mxu0 0
    %545 = vmatpush1.bf16.msra.mxu0 0
    %546 = vmatprep.subr.bf16.mxu0 0
    %547 = vmatpush1.bf16.msra.mxu0 0
    %548 = vmatprep.subr.bf16.mxu0 0
    %549 = vmatpush1.bf16.msra.mxu0 0
    %550 = vmatprep.subr.bf16.mxu0 0
    %551 = vmatpush1.bf16.msra.mxu0 0
    %552 = vmatprep.subr.bf16.mxu0 0
    %553 = vmatpush1.bf16.msra.mxu0 0
    %554 = vmatprep.subr.bf16.mxu0 0
    %555 = vmatpush1.bf16.msra.mxu0 0
    %556 = vmatprep.subr.bf16.mxu0 0
    %557 = vmatpush1.bf16.msra.mxu0 0
    %558 = vmatprep.subr.bf16.mxu0 0
    %559 = vmatpush1.bf16.msra.mxu0 0
    %560 = vmatprep.mubr.bf16.mxu0 0
    %561 = vmatmul.mubr.bf16.gmra.mrb[0].mxu0 %v523
    %v562 = vpop.f32.mrb[0].mxu0
    %v563 = vadd.f32 %v520, %v562
    %v564 = vpop.f32.mrb[0].mxu0
    %v565 = vpop.f32.mrb[0].mxu0
    %v566 = vpop.f32.mrb[0].mxu0
    %567 = vdwg.mxu0
    %v568 = vmul.f32 %v563, 0.5
    %v569 = vtanh.pop %v568
    %v570 = vmul.f32 %v569, 0.5
    %v571 = vadd.f32 %v570, 0.5
    %v572 = vmul.f32 %v563, %v571
    %v573 = vadd.f32 %v572, %v504
    %s574 = scalar_lea.vmem %s3, 24
    %v575 = vld [vmem:[%s574] sm:$0xf]
    %v576 = vld [vmem:[%s574 + $0x4] sm:$0xf]
    %v577 = vpack.c.bf16 %v573, %v573
    %s578 = scalar_lea.vmem %s4, 48
    %v579 = vld [vmem:[%s578] sm:$0xff]
    %v580 = vld [vmem:[%s578 + $0x8] sm:$0xff]
    %582 = vset.pattern.permute.xlu0 0
    %583 = vperm.xlu0 %582, %v579
    %v584 = vpop.permute.xlu0 %583
    %587 = vset.pattern.permute.xlu0 0
    %588 = vperm.xlu0 %587, %v580
    %v589 = vpop.permute.xlu0 %588
    %v593 = vunpack.c.l.b16 %v575
    %v594 = vunpack.c.l.b16 %v576
    %v595 = vpack.c.b16 %v594, %v593
    %v597 = vsel %vm151, %v595, 0
    %v600 = vsel %vm155, %v577, 0
    %602 = vmatprep.subr.bf16.mxu0 0
    %603 = vmatpush1.bf16.msra.mxu0 %v600
    %604 = vmatprep.subr.bf16.mxu0 0
    %605 = vmatpush1.bf16.msra.mxu0 0
    %606 = vmatprep.subr.bf16.mxu0 0
    %607 = vmatpush1.bf16.msra.mxu0 0
    %608 = vmatprep.subr.bf16.mxu0 0
    %609 = vmatpush1.bf16.msra.mxu0 0
    %610 = vmatprep.subr.bf16.mxu0 0
    %611 = vmatpush1.bf16.msra.mxu0 0
    %612 = vmatprep.subr.bf16.mxu0 0
    %613 = vmatpush1.bf16.msra.mxu0 0
    %614 = vmatprep.subr.bf16.mxu0 0
    %615 = vmatpush1.bf16.msra.mxu0 0
    %616 = vmatprep.subr.bf16.mxu0 0
    %617 = vmatpush1.bf16.msra.mxu0 0
    %618 = vmatprep.subr.bf16.mxu0 0
    %619 = vmatpush1.bf16.msra.mxu0 0
    %620 = vmatprep.subr.bf16.mxu0 0
    %621 = vmatpush1.bf16.msra.mxu0 0
    %622 = vmatprep.subr.bf16.mxu0 0
    %623 = vmatpush1.bf16.msra.mxu0 0
    %624 = vmatprep.subr.bf16.mxu0 0
    %625 = vmatpush1.bf16.msra.mxu0 0
    %626 = vmatprep.subr.bf16.mxu0 0
    %627 = vmatpush1.bf16.msra.mxu0 0
    %628 = vmatprep.subr.bf16.mxu0 0
    %629 = vmatpush1.bf16.msra.mxu0 0
    %630 = vmatprep.subr.bf16.mxu0 0
    %631 = vmatpush1.bf16.msra.mxu0 0
    %632 = vmatprep.subr.bf16.mxu0 0
    %633 = vmatpush1.bf16.msra.mxu0 0
    %634 = vmatprep.mubr.bf16.mxu0 0
    %635 = vmatmul.mubr.bf16.gmra.mrb[0].mxu0 %v597
    %v636 = vpop.f32.mrb[0].mxu0
    %v637 = vadd.f32 %v584, %v636
    %v638 = vpop.f32.mrb[0].mxu0
    %v639 = vpop.f32.mrb[0].mxu0
    %v640 = vadd.f32 %v589, %v639
    %v641 = vpop.f32.mrb[0].mxu0
    %642 = vdwg.mxu0
    %v643 = vmul.f32 %v637, 0.5
    %v644 = vmul.f32 %v640, 0.5
    %v645 = vtanh.pop %v643
    %v646 = vtanh.pop %v644
    %v647 = vmul.f32 %v645, 0.5
    %v648 = vmul.f32 %v646, 0.5
    %v649 = vadd.f32 %v647, 0.5
    %v650 = vadd.f32 %v648, 0.5
    %v651 = vmul.f32 %v637, %v649
    %v652 = vmul.f32 %v640, %v650
    %653 = vrot.lane.b32.xlu0 %v651, 1
    %v654 = vpop.permute.xlu0 %653
    %v655 = vmul.f32 %v654, %v52
    %656 = vrot.lane.b32.xlu0 %v651, 127
    %v657 = vpop.permute.xlu0 %656
    %v658 = vmul.f32 %v657, %v55
    %s659 = scalar_lea.vmem %s5, 12
    %v660 = vld [vmem:[%s659] sm:$0xf]
    %v661 = vpack.c.bf16 %v651, %v655
    %v662 = vpack.c.bf16 %v658, %v658
    %s663 = scalar_lea.vmem %s6, 24
    %v664 = vld [vmem:[%s663] sm:$0xff]
    %666 = vset.pattern.permute.xlu0 0
    %667 = vperm.xlu0 %666, %v664
    %v668 = vpop.permute.xlu0 %667
    %v671 = vsel %vm225, %v660, 0
    %v674 = vsel %vm155, %v662, 0
    %676 = vmatprep.subr.bf16.mxu0 0
    %677 = vmatpush1.bf16.msra.mxu0 %v661
    %678 = vmatprep.subr.bf16.mxu0 0
    %679 = vmatpush1.bf16.msra.mxu0 %v674
    %680 = vmatprep.subr.bf16.mxu0 0
    %681 = vmatpush1.bf16.msra.mxu0 0
    %682 = vmatprep.subr.bf16.mxu0 0
    %683 = vmatpush1.bf16.msra.mxu0 0
    %684 = vmatprep.subr.bf16.mxu0 0
    %685 = vmatpush1.bf16.msra.mxu0 0
    %686 = vmatprep.subr.bf16.mxu0 0
    %687 = vmatpush1.bf16.msra.mxu0 0
    %688 = vmatprep.subr.bf16.mxu0 0
    %689 = vmatpush1.bf16.msra.mxu0 0
    %690 = vmatprep.subr.bf16.mxu0 0
    %691 = vmatpush1.bf16.msra.mxu0 0
    %692 = vmatprep.subr.bf16.mxu0 0
    %693 = vmatpush1.bf16.msra.mxu0 0
    %694 = vmatprep.subr.bf16.mxu0 0
    %695 = vmatpush1.bf16.msra.mxu0 0
    %696 = vmatprep.subr.bf16.mxu0 0
    %697 = vmatpush1.bf16.msra.mxu0 0
    %698 = vmatprep.subr.bf16.mxu0 0
    %699 = vmatpush1.bf16.msra.mxu0 0
    %700 = vmatprep.subr.bf16.mxu0 0
    %701 = vmatpush1.bf16.msra.mxu0 0
    %702 = vmatprep.subr.bf16.mxu0 0
    %703 = vmatpush1.bf16.msra.mxu0 0
    %704 = vmatprep.subr.bf16.mxu0 0
    %705 = vmatpush1.bf16.msra.mxu0 0
    %706 = vmatprep.subr.bf16.mxu0 0
    %707 = vmatpush1.bf16.msra.mxu0 0
    %708 = vmatprep.mubr.bf16.mxu0 0
    %709 = vmatmul.mubr.bf16.gmra.mrb[0].mxu0 %v671
    %v710 = vpop.f32.mrb[0].mxu0
    %v711 = vadd.f32 %v668, %v710
    %v712 = vpop.f32.mrb[0].mxu0
    %v713 = vpop.f32.mrb[0].mxu0
    %v714 = vpop.f32.mrb[0].mxu0
    %715 = vdwg.mxu0
    %v716 = vmul.f32 %v711, 0.5
    %v717 = vtanh.pop %v716
    %v718 = vmul.f32 %v717, 0.5
    %v719 = vadd.f32 %v718, 0.5
    %v720 = vmul.f32 %v711, %v719
    %v721 = vadd.f32 %v720, %v652
    %v722 = vadd.f32 %v721, %v129
    %v723 = vld [vmem:[%s7] sm:$0xf]
    %v724 = vld [vmem:[%s7 + $0x4] sm:$0xf]
    %v725 = vpack.c.bf16 %v130, %v722
    %v726 = vld [vmem:[%s8] sm:$0xff]
    %v727 = vld [vmem:[%s8 + $0x8] sm:$0xff]
    %729 = vset.pattern.permute.xlu0 0
    %730 = vperm.xlu0 %729, %v726
    %v731 = vpop.permute.xlu0 %730
    %734 = vset.pattern.permute.xlu0 0
    %735 = vperm.xlu0 %734, %v727
    %v736 = vpop.permute.xlu0 %735
    %v740 = vunpack.c.l.b16 %v723
    %v741 = vunpack.c.l.b16 %v724
    %v742 = vpack.c.b16 %v741, %v740
    %v744 = vsel %vm76, %v742, 0
    %746 = vmatprep.subr.bf16.mxu0 0
    %747 = vmatpush1.bf16.msra.mxu0 %v725
    %748 = vmatprep.subr.bf16.mxu0 0
    %749 = vmatpush1.bf16.msra.mxu0 0
    %750 = vmatprep.subr.bf16.mxu0 0
    %751 = vmatpush1.bf16.msra.mxu0 0
    %752 = vmatprep.subr.bf16.mxu0 0
    %753 = vmatpush1.bf16.msra.mxu0 0
    %754 = vmatprep.subr.bf16.mxu0 0
    %755 = vmatpush1.bf16.msra.mxu0 0
    %756 = vmatprep.subr.bf16.mxu0 0
    %757 = vmatpush1.bf16.msra.mxu0 0
    %758 = vmatprep.subr.bf16.mxu0 0
    %759 = vmatpush1.bf16.msra.mxu0 0
    %760 = vmatprep.subr.bf16.mxu0 0
    %761 = vmatpush1.bf16.msra.mxu0 0
    %762 = vmatprep.subr.bf16.mxu0 0
    %763 = vmatpush1.bf16.msra.mxu0 0
    %764 = vmatprep.subr.bf16.mxu0 0
    %765 = vmatpush1.bf16.msra.mxu0 0
    %766 = vmatprep.subr.bf16.mxu0 0
    %767 = vmatpush1.bf16.msra.mxu0 0
    %768 = vmatprep.subr.bf16.mxu0 0
    %769 = vmatpush1.bf16.msra.mxu0 0
    %770 = vmatprep.subr.bf16.mxu0 0
    %771 = vmatpush1.bf16.msra.mxu0 0
    %772 = vmatprep.subr.bf16.mxu0 0
    %773 = vmatpush1.bf16.msra.mxu0 0
    %774 = vmatprep.subr.bf16.mxu0 0
    %775 = vmatpush1.bf16.msra.mxu0 0
    %776 = vmatprep.subr.bf16.mxu0 0
    %777 = vmatpush1.bf16.msra.mxu0 0
    %778 = vmatprep.mubr.bf16.mxu0 0
    %779 = vmatmul.mubr.bf16.gmra.mrb[0].mxu0 %v744
    %v780 = vpop.f32.mrb[0].mxu0
    %v781 = vadd.f32 %v731, %v780
    %v782 = vpop.f32.mrb[0].mxu0
    %v783 = vpop.f32.mrb[0].mxu0
    %v784 = vadd.f32 %v736, %v783
    %v785 = vpop.f32.mrb[0].mxu0
    %786 = vdwg.mxu0
    %v787 = vmul.f32 %v781, 0.5
    %v788 = vmul.f32 %v784, 0.5
    %v789 = vtanh.pop %v787
    %v790 = vtanh.pop %v788
    %v791 = vmul.f32 %v789, 0.5
    %v792 = vmul.f32 %v790, 0.5
    %v793 = vadd.f32 %v791, 0.5
    %v794 = vadd.f32 %v792, 0.5
    %v795 = vmul.f32 %v781, %v793
    %v796 = vmul.f32 %v784, %v794
    %797 = vst [vmem:[#allocation2] sm:$0xff] %v795
    %798 = vst [vmem:[#allocation2 + $0x8] sm:$0xff] %v796
    // Predicated region
    $region38: #{tpu_custom_call.1} parent=1 // pred_check
      _
    $region39: #{tpu_custom_call.1} parent=1 // pred_check_branch
      %800 = sbr.rel (0) target = $region41
    $region40: #{tpu_custom_call.1} parent=1 // pred_region
      %s802 = ssub.s32 256, 256
      %803 = vsyncadd [#allocation3], %s802
      %s804 = sshll.u32 [#allocation2], 4
      %s805 = int_to_ptr.vmem [resolvable:$true] %s804
      %810 = dma.vmem_to_hbm [thread:$0]  %s805, 256, %s9, [#allocation3], 128, 128, 8
    $region41: #{tpu_custom_call.1} parent=1 // pred_fallthru
      _
    // Predicated region
    $region42: #{tpu_custom_call.1} parent=1 // pred_check
      _
    $region43: #{tpu_custom_call.1} parent=1 // pred_check_branch
      %812 = sbr.rel (0) target = $region45
    $region44: #{tpu_custom_call.1} parent=1 // pred_region
      %813 = dma.done [#allocation3], 256
    $region45: #{tpu_custom_call.1} parent=1 // pred_fallthru
      _
    %814 = vsyncpa [#allocation3], 1

</llo_original>
